<compile_context>
chip_gen: v7x
topology: tpu7x:2x2x1
jax: 0.10.0
libtpu: 0.0.40
codegen_flags: <defaults>
</compile_context>

<pallas_src>
import jax
import jax.numpy as jnp
from jax.experimental import pallas as pl
from jax.experimental.pallas import tpu as pltpu


# ----------------------------------------------------------------------------
# Primary kernel: aliased no-op (zero data movement inside the kernel).
# ----------------------------------------------------------------------------
def _identity_noop_kernel(x_hbm_ref, o_hbm_ref):
    # Output is aliased to the input (input_output_aliases={0: 0}), so the
    # correct bytes are already in the output buffer.  Nothing to do.
    # (Alternative: pltpu.touch(o_hbm_ref) to pin an explicit dependency;
    # relying on the alias is sufficient here.)
    del x_hbm_ref, o_hbm_ref


def _identity_noop(x: jax.Array) -> jax.Array:
    return pl.pallas_call(
        _identity_noop_kernel,
        out_shape=jax.ShapeDtypeStruct(x.shape, x.dtype),
        in_specs=[pl.BlockSpec(memory_space=pl.ANY)],
        out_specs=pl.BlockSpec(memory_space=pl.ANY),
        input_output_aliases={0: 0},
    )(x)


# ----------------------------------------------------------------------------
# Secondary kernel: forced copy as a single HBM -> HBM DMA (no VMEM staging).
# Use only when a fresh, non-aliased output buffer is explicitly required.
# ----------------------------------------------------------------------------
def _identity_copy_kernel(x_hbm_ref, o_hbm_ref, copy_sem):
    copy = pltpu.make_async_copy(x_hbm_ref, o_hbm_ref, copy_sem)
    copy.start()
    copy.wait()


def identity_copy(x: jax.Array) -> jax.Array:
    """Identity that materializes a fresh output buffer (one HBM->HBM DMA)."""
    return pl.pallas_call(
        _identity_copy_kernel,
        out_shape=jax.ShapeDtypeStruct(x.shape, x.dtype),
        in_specs=[pl.BlockSpec(memory_space=pl.ANY)],
        out_specs=pl.BlockSpec(memory_space=pl.ANY),
        scratch_shapes=[pltpu.SemaphoreType.DMA(())],
    )(x)


# ----------------------------------------------------------------------------
# Public wrapper: matches nn.Identity.forward semantics.
# ----------------------------------------------------------------------------
_SMALL_BYTES = 1 << 20  # 1 MiB: below this, kernel-launch latency dominates.


def identity(x: jax.Array, *, use_kernel: bool = False) -> jax.Array:
    """Identity forward pass.

    Fast path: small inputs are returned as-is (zero cost on every TPU
    generation).  Otherwise (or when `use_kernel=True`) dispatch the aliased
    no-op Pallas kernel, which performs zero HBM traffic inside the kernel.
    """
    if not use_kernel and x.size * x.dtype.itemsize < _SMALL_BYTES:
        return x
    return _identity_noop(x)


if __name__ == "__main__":
    key = jax.random.PRNGKey(0)
    # Small NCHW-ish input consistent with typical usage of Identity.
    x = jax.random.normal(key, (2, 4, 16, 16), dtype=jnp.float32)

    # Wrapper fast path (what real callers hit at this size).
    y_fast = identity(x)

    # Force the aliased no-op Pallas kernel so the kernel itself is exercised.
    y_kernel = identity(x, use_kernel=True)

    # Forced-copy kernel (fresh output buffer via one HBM->HBM DMA).
    y_copy = identity_copy(x)

    jax.block_until_ready((y_fast, y_kernel, y_copy))

    for y in (y_fast, y_kernel, y_copy):
        assert y.shape == x.shape and y.dtype == x.dtype
        assert bool(jnp.all(y == x))
    print("KERNEL_OK")
</pallas_src>

<mosaic_0001>
module attributes {stable_mosaic.version = 11 : i64} {
  func.func @_identity_noop_kernel(%arg0: memref<2x4x16x16xf32, #tpu.memory_space<any>>, %arg1: memref<2x4x16x16xf32, #tpu.memory_space<any>>) attributes {dimension_semantics = [], scalar_prefetch = 0 : i64, scratch_operands = 0 : i64, tpu.core_type = #tpu.core_type<tc>} {
    return
  }
}

</mosaic_0001>

<llo_original>
// kernel: tpu_custom_call.1
$region0: #{tpu_custom_call.1}
  #allocation0 [shape = 'u32[]', space=smem, size = 0x4, offset = 0x4, fixed_abs, tag = 'smem constant byte address 0x4 - core index']
  #allocation1 [shape = 'u32[144,128]{1,0:T(1,128)}', space=vmem, size = 0x12000, scoped, tag = 'internal scratch']
  %s0 = inlined_call_operand.hbm [shape: f32[2,4,16,16], index: 0, kind: input, shape index: {}, may-alias: {0,1}]
  %s1 = inlined_call_operand.hbm [shape: f32[2,4,16,16], index: 1, kind: output, shape index: {}, may-alias: {0,1}]
  %s2 = sld [smem:[#allocation0]]
  $region2: #{tpu_custom_call.1} parent=0
    _
  %s4 = ssub.s32 1, %s2
  %s5 = scalar_select 0, %s4, %s2

</llo_original>
